<compile_context>
chip_gen: v6e
topology: v6e:2x2x1
jax: 0.10.0
libtpu: 0.0.40
codegen_flags: <defaults>
</compile_context>

<pallas_src>
import functools

import jax
import jax.numpy as jnp
from jax.experimental import pallas as pl
from jax.experimental.pallas import tpu as pltpu


def _shift_up(x, k, hw, lane_dense):
    """Returns y with y[..., i] = x[..., (i + k) % hw]."""
    if lane_dense:
        # XLU lane rotate (jnp.roll semantics: result[i] = x[(i - shift) % hw]).
        return pltpu.roll(x, shift=hw - k, axis=1)
    # Fallback for H*W not a multiple of 128 (rotate on a padded minor dim).
    return jnp.concatenate([x[:, k:], x[:, :k]], axis=1)


def _tv_kernel(x_ref, h_ref, w_ref, acc_ref, *, hw, w, n_planes, p, pchunk,
               unroll, lane_dense):
    core = pl.program_id(0)
    step = pl.program_id(1)
    steps = pl.num_programs(1)

    @pl.when(step == 0)
    def _():
        acc_ref[0] = jnp.float32(0.0)
        acc_ref[1] = jnp.float32(0.0)

    # Global index of the first plane in this block.  Deliberately UNclamped
    # (only the BlockSpec index_map clamps the DMA), so duplicated tail blocks
    # get plane ids >= n_planes and are masked to exactly zero below.
    plane0 = (core * steps + step) * p

    # Seam masks are constant across chunks -> build once, outside the loop.
    lane = jax.lax.broadcasted_iota(jnp.int32, (pchunk, hw), 1)
    h_mask = lane < (hw - w)             # drop the last image row
    w_mask = (lane % w) != (w - 1)       # drop the last image column

    def body(j, carry):
        sh, sw = carry
        start = pl.multiple_of(j * pchunk, pchunk)
        x = x_ref[pl.ds(start, pchunk), :].astype(jnp.float32)
        # Zero planes past the real plane count (partial tail block and
        # duplicated blocks contain garbage); zero planes contribute zero.
        pid = plane0 + start + jax.lax.broadcasted_iota(jnp.int32, (pchunk, 1), 0)
        x = jnp.where(pid < n_planes, x, 0.0)
        dh = _shift_up(x, w, hw, lane_dense) - x     # x[h+1, w] - x[h, w]
        dw = _shift_up(x, 1, hw, lane_dense) - x     # x[h, w+1] - x[h, w]
        sh = sh + jnp.sum(jnp.where(h_mask, dh * dh, 0.0))
        sw = sw + jnp.sum(jnp.where(w_mask, dw * dw, 0.0))
        return sh, sw

    sh, sw = jax.lax.fori_loop(0, p // pchunk, body,
                               (jnp.float32(0.0), jnp.float32(0.0)),
                               unroll=unroll)
    acc_ref[0] += sh
    acc_ref[1] += sw

    @pl.when(step == steps - 1)
    def _():
        h_ref[0, 0] = acc_ref[0]
        w_ref[0, 0] = acc_ref[1]


def _chip_config():
    """(n_tensorcores, target_block_bytes, vmem_limit_bytes) for this chip."""
    try:
        kind = jax.devices()[0].device_kind.lower()
    except Exception:
        kind = ""
    if "v7" in kind or "7x" in kind:
        # 2 TCs / chip but only 64 MiB VMEM: modest blocks, conservative limit.
        return 2, 8 * 1024 * 1024, 40 * 1024 * 1024
    if "v4" in kind or "v5p" in kind:
        # Megacore (2 TCs), 128 MiB VMEM.
        return 2, 16 * 1024 * 1024, 64 * 1024 * 1024
    if "v5" in kind or "v6" in kind:
        # Single TC, 128 MiB VMEM: bigger blocks amortise per-step overhead.
        return 1, 16 * 1024 * 1024, 64 * 1024 * 1024
    return 1, 8 * 1024 * 1024, 40 * 1024 * 1024


def tv_loss(x, tv_loss_weight=1.0):
    """Matches TVLoss(TVLoss_weight=tv_loss_weight).forward(x) for NCHW x."""
    B, C, H, W = x.shape
    BC = B * C
    HW = H * W

    # Free view: one lane-dense row per (batch, channel) image plane.  No pad.
    xr = x.reshape(BC, HW)

    n_cores, target_bytes, vmem_limit = _chip_config()

    # Planes per inner-loop chunk: keep per-chunk temporaries (~f32 cast, dh,
    # dw) at ~8K elements so they stay vreg / sub-100KiB sized instead of
    # scaling with the DMA block.
    chunk_elems = 8 * 1024
    pchunk = max(1, min(chunk_elems // HW, 512))
    pchunk = (pchunk // 8) * 8 if pchunk >= 8 else (1 << (pchunk.bit_length() - 1))

    # Planes per grid block (one contiguous HBM DMA per step, double-buffered).
    plane_bytes = HW * x.dtype.itemsize
    align = pchunk if pchunk >= 8 else 8            # sublane-aligned block dim
    if BC >= align:
        P = max(align,
                (min(max(target_bytes // plane_bytes, 1), BC) // align) * align)
    else:
        # Tiny inputs: a single block covering every plane (full-extent block
        # dims are always legal even when unaligned).
        P = BC
        pchunk = BC

    num_blocks = pl.cdiv(BC, P)
    steps = pl.cdiv(num_blocks, n_cores)

    kernel = functools.partial(
        _tv_kernel, hw=HW, w=W, n_planes=BC, p=P, pchunk=pchunk,
        unroll=min(8, P // pchunk), lane_dense=(HW % 128 == 0))

    cost = pl.CostEstimate(
        flops=3 * BC * ((H - 1) * W + H * (W - 1)),   # sub + mul + add per diff
        transcendentals=0,
        bytes_accessed=BC * HW * x.dtype.itemsize + 2 * n_cores * 4,
    )

    h_tv, w_tv = pl.pallas_call(
        kernel,
        out_shape=(
            jax.ShapeDtypeStruct((n_cores, 1), jnp.float32),
            jax.ShapeDtypeStruct((n_cores, 1), jnp.float32),
        ),
        grid=(n_cores, steps),
        in_specs=[
            # Core c owns plane-blocks [c*steps, (c+1)*steps).  Excess tail
            # blocks are clamped onto the last real block (their contribution
            # is masked to zero in-kernel) -- no jnp.pad / extra HBM traffic.
            pl.BlockSpec(
                (P, HW),
                lambda c, i: (jnp.minimum(c * steps + i, num_blocks - 1), 0)),
        ],
        out_specs=(
            pl.BlockSpec((1, 1), lambda c, i: (c, 0), memory_space=pltpu.SMEM),
            pl.BlockSpec((1, 1), lambda c, i: (c, 0), memory_space=pltpu.SMEM),
        ),
        scratch_shapes=[pltpu.SMEM((2,), jnp.float32)],   # running (h, w) sums
        compiler_params=pltpu.CompilerParams(
            dimension_semantics=("parallel", "arbitrary"),
            vmem_limit_bytes=vmem_limit,
        ),
        cost_estimate=cost,
    )(xr)

    count_h = C * (H - 1) * W    # _tensor_size(x[:, :, 1:, :])
    count_w = C * H * (W - 1)    # _tensor_size(x[:, :, :, 1:])
    h_sum = jnp.sum(h_tv)        # combine per-core partial sums
    w_sum = jnp.sum(w_tv)
    return tv_loss_weight * 2.0 * (h_sum / count_h + w_sum / count_w) / B


def tv_loss_ref(x, tv_loss_weight=1.0):
    """Pure-JAX reference (mirrors the PyTorch forward exactly)."""
    B, C, H, W = x.shape
    count_h = C * (H - 1) * W
    count_w = C * H * (W - 1)
    h_tv = jnp.sum(jnp.square(x[:, :, 1:, :] - x[:, :, : H - 1, :]))
    w_tv = jnp.sum(jnp.square(x[:, :, :, 1:] - x[:, :, :, : W - 1]))
    return tv_loss_weight * 2.0 * (h_tv / count_h + w_tv / count_w) / B


if __name__ == "__main__":
    key = jax.random.PRNGKey(0)
    x = jax.random.normal(key, (2, 4, 16, 16), dtype=jnp.float32)  # NCHW

    out = jax.block_until_ready(tv_loss(x, tv_loss_weight=1.0))
    ref = jax.block_until_ready(tv_loss_ref(x, tv_loss_weight=1.0))

    assert jnp.allclose(out, ref, rtol=1e-5, atol=1e-5), (out, ref)
    print("KERNEL_OK")
</pallas_src>

<mosaic_0001>
module attributes {stable_mosaic.version = 11 : i64} {
  func.func @_tv_kernel(%arg0: i32, %arg1: i32, %arg2: memref<8x256xf32, #tpu.memory_space<vmem>>, %arg3: memref<1x1xf32, #tpu.memory_space<smem>>, %arg4: memref<1x1xf32, #tpu.memory_space<smem>>, %arg5: memref<2xf32, #tpu.memory_space<smem>>) attributes {dimension_semantics = [#tpu.dimension_semantics<parallel>, #tpu.dimension_semantics<arbitrary>], iteration_bounds = array<i64: 1, 1>, scalar_prefetch = 0 : i64, scratch_operands = 1 : i64, tpu.core_type = #tpu.core_type<tc>, window_params = [{transform_indices = @transform_0, window_bounds = array<i64: 8, 256>}, {transform_indices = @transform_1, window_bounds = array<i64: 1, 1>}, {transform_indices = @transform_2, window_bounds = array<i64: 1, 1>}]} {
    %c0_i32 = arith.constant 0 : i32
    %0 = arith.cmpi eq, %arg1, %c0_i32 : i32
    %1 = arith.extui %0 : i1 to i32
    %c0_i32_0 = arith.constant 0 : i32
    %2 = arith.cmpi ne, %1, %c0_i32_0 : i32
    scf.if %2 {
      %cst_22 = arith.constant 0.000000e+00 : f32
      %c0_23 = arith.constant 0 : index
      %70 = memref.load %arg5[%c0_23] : memref<2xf32, #tpu.memory_space<smem>>
      memref.store %cst_22, %arg5[%c0_23] : memref<2xf32, #tpu.memory_space<smem>>
      %cst_24 = arith.constant 0.000000e+00 : f32
      %c1_25 = arith.constant 1 : index
      %71 = memref.load %arg5[%c1_25] : memref<2xf32, #tpu.memory_space<smem>>
      memref.store %cst_24, %arg5[%c1_25] : memref<2xf32, #tpu.memory_space<smem>>
    } else {
    }
    %c1_i32 = arith.constant 1 : i32
    %3 = arith.muli %arg0, %c1_i32 : i32
    %4 = arith.addi %3, %arg1 : i32
    %c8_i32 = arith.constant 8 : i32
    %5 = arith.muli %4, %c8_i32 : i32
    %6 = tpu.iota {dimensions = array<i32: 1>} : vector<8x256xi32>
    %c240_i32 = arith.constant 240 : i32
    %7 = vector.broadcast %c240_i32 : i32 to vector<8x256xi32>
    %8 = arith.cmpi slt, %6, %7 : vector<8x256xi32>
    %c16_i32 = arith.constant 16 : i32
    %c0_i32_1 = arith.constant 0 : i32
    %9 = arith.cmpi eq, %c16_i32, %c0_i32_1 : i32
    %c1_i32_2 = arith.constant 1 : i32
    %10 = arith.select %9, %c1_i32_2, %c16_i32 : i32
    %11 = vector.broadcast %10 : i32 to vector<8x256xi32>
    %12 = arith.remsi %6, %11 : vector<8x256xi32>
    %c0_i32_3 = arith.constant 0 : i32
    %13 = vector.broadcast %c0_i32_3 : i32 to vector<8x256xi32>
    %14 = arith.cmpi ne, %12, %13 : vector<8x256xi32>
    %c0_i32_4 = arith.constant 0 : i32
    %15 = vector.broadcast %c0_i32_4 : i32 to vector<8x256xi32>
    %16 = arith.cmpi slt, %12, %15 : vector<8x256xi32>
    %c0_i32_5 = arith.constant 0 : i32
    %17 = arith.cmpi slt, %10, %c0_i32_5 : i32
    %18 = vector.broadcast %17 : i1 to vector<8x256xi1>
    %19 = vector.broadcast %18 : vector<8x256xi1> to vector<8x256xi1>
    %20 = arith.xori %16, %19 : vector<8x256xi1>
    %21 = arith.andi %20, %14 : vector<8x256xi1>
    %22 = vector.broadcast %10 : i32 to vector<8x256xi32>
    %23 = arith.addi %12, %22 : vector<8x256xi32>
    %24 = arith.select %21, %23, %12 : vector<8x256xi1>, vector<8x256xi32>
    %c15_i32 = arith.constant 15 : i32
    %25 = vector.broadcast %c15_i32 : i32 to vector<8x256xi32>
    %26 = arith.cmpi ne, %24, %25 : vector<8x256xi32>
    %cst = arith.constant 0.000000e+00 : f32
    %cst_6 = arith.constant 0.000000e+00 : f32
    %c0_i32_7 = arith.constant 0 : i32
    %c8_i32_8 = arith.constant 8 : i32
    %27 = arith.muli %c0_i32_7, %c8_i32_8 : i32
    %28 = tpu.assume_multiple %27, 8 : i32
    %29 = arith.index_cast %28 : i32 to index
    %c0 = arith.constant 0 : index
    %30 = vector.load %arg2[%29, %c0] : memref<8x256xf32, #tpu.memory_space<vmem>>, vector<8x256xf32>
    %31 = arith.addi %5, %28 : i32
    %32 = tpu.iota {dimensions = array<i32: 0>} : vector<8x1xi32>
    %33 = vector.broadcast %31 : i32 to vector<8x1xi32>
    %34 = arith.addi %33, %32 : vector<8x1xi32>
    %c8_i32_9 = arith.constant 8 : i32
    %35 = vector.broadcast %c8_i32_9 : i32 to vector<8x1xi32>
    %36 = arith.cmpi slt, %34, %35 : vector<8x1xi32>
    %cst_10 = arith.constant 0.000000e+00 : f32
    %37 = vector.shape_cast %36 : vector<8x1xi1> to vector<8x1xi1>
    %38 = vector.broadcast %37 : vector<8x1xi1> to vector<8x256xi1>
    %39 = vector.broadcast %cst_10 : f32 to vector<8x256xf32>
    %40 = arith.select %38, %30, %39 : vector<8x256xi1>, vector<8x256xf32>
    %c240_i32_11 = arith.constant 240 : i32
    %41 = tpu.dynamic_rotate %40 by %c240_i32_11 dim 1 : vector<8x256xf32>, i32 -> vector<8x256xf32>
    %42 = arith.subf %41, %40 : vector<8x256xf32>
    %c255_i32 = arith.constant 255 : i32
    %43 = tpu.dynamic_rotate %40 by %c255_i32 dim 1 : vector<8x256xf32>, i32 -> vector<8x256xf32>
    %44 = arith.subf %43, %40 : vector<8x256xf32>
    %45 = arith.mulf %42, %42 : vector<8x256xf32>
    %cst_12 = arith.constant 0.000000e+00 : f32
    %46 = vector.broadcast %cst_12 : f32 to vector<8x256xf32>
    %47 = arith.select %8, %45, %46 : vector<8x256xi1>, vector<8x256xf32>
    %48 = vector.shape_cast %47 : vector<8x256xf32> to vector<1x8x256xf32>
    %cst_13 = arith.constant dense<0.000000e+00> : vector<1xf32>
    %49 = vector.multi_reduction <add>, %48, %cst_13 [1, 2] : vector<1x8x256xf32> to vector<1xf32>
    %50 = vector.shape_cast %49 : vector<1xf32> to vector<1x1x1xf32>
    %51 = vector.extract %50[0, 0, 0] : f32 from vector<1x1x1xf32>
    %52 = arith.addf %cst, %51 : f32
    %53 = arith.mulf %44, %44 : vector<8x256xf32>
    %cst_14 = arith.constant 0.000000e+00 : f32
    %54 = vector.broadcast %cst_14 : f32 to vector<8x256xf32>
    %55 = arith.select %26, %53, %54 : vector<8x256xi1>, vector<8x256xf32>
    %56 = vector.shape_cast %55 : vector<8x256xf32> to vector<1x8x256xf32>
    %cst_15 = arith.constant dense<0.000000e+00> : vector<1xf32>
    %57 = vector.multi_reduction <add>, %56, %cst_15 [1, 2] : vector<1x8x256xf32> to vector<1xf32>
    %58 = vector.shape_cast %57 : vector<1xf32> to vector<1x1x1xf32>
    %59 = vector.extract %58[0, 0, 0] : f32 from vector<1x1x1xf32>
    %60 = arith.addf %cst_6, %59 : f32
    %c1_i32_16 = arith.constant 1 : i32
    %c0_17 = arith.constant 0 : index
    %61 = memref.load %arg5[%c0_17] : memref<2xf32, #tpu.memory_space<smem>>
    %62 = arith.addf %61, %52 : f32
    %c0_18 = arith.constant 0 : index
    %63 = memref.load %arg5[%c0_18] : memref<2xf32, #tpu.memory_space<smem>>
    memref.store %62, %arg5[%c0_18] : memref<2xf32, #tpu.memory_space<smem>>
    %c1 = arith.constant 1 : index
    %64 = memref.load %arg5[%c1] : memref<2xf32, #tpu.memory_space<smem>>
    %65 = arith.addf %64, %60 : f32
    %c1_19 = arith.constant 1 : index
    %66 = memref.load %arg5[%c1_19] : memref<2xf32, #tpu.memory_space<smem>>
    memref.store %65, %arg5[%c1_19] : memref<2xf32, #tpu.memory_space<smem>>
    %c0_i32_20 = arith.constant 0 : i32
    %67 = arith.cmpi eq, %arg1, %c0_i32_20 : i32
    %68 = arith.extui %67 : i1 to i32
    %c0_i32_21 = arith.constant 0 : i32
    %69 = arith.cmpi ne, %68, %c0_i32_21 : i32
    scf.if %69 {
      %c0_22 = arith.constant 0 : index
      %70 = memref.load %arg5[%c0_22] : memref<2xf32, #tpu.memory_space<smem>>
      %c0_23 = arith.constant 0 : index
      %c0_24 = arith.constant 0 : index
      %71 = memref.load %arg3[%c0_23, %c0_24] : memref<1x1xf32, #tpu.memory_space<smem>>
      memref.store %70, %arg3[%c0_23, %c0_24] : memref<1x1xf32, #tpu.memory_space<smem>>
      %c1_25 = arith.constant 1 : index
      %72 = memref.load %arg5[%c1_25] : memref<2xf32, #tpu.memory_space<smem>>
      %c0_26 = arith.constant 0 : index
      %c0_27 = arith.constant 0 : index
      %73 = memref.load %arg4[%c0_26, %c0_27] : memref<1x1xf32, #tpu.memory_space<smem>>
      memref.store %72, %arg4[%c0_26, %c0_27] : memref<1x1xf32, #tpu.memory_space<smem>>
    } else {
    }
    return
  }
  func.func @transform_0(%arg0: i32, %arg1: i32) -> (i32, i32) {
    %c1_i32 = arith.constant 1 : i32
    %0 = arith.muli %arg0, %c1_i32 : i32
    %1 = arith.addi %0, %arg1 : i32
    %c0_i32 = arith.constant 0 : i32
    %2 = arith.minsi %1, %c0_i32 : i32
    %c0_i32_0 = arith.constant 0 : i32
    %c0_i32_1 = arith.constant 0 : i32
    return %2, %c0_i32_0 : i32, i32
  }
  func.func @transform_1(%arg0: i32, %arg1: i32) -> (i32, i32) {
    %c0_i32 = arith.constant 0 : i32
    %c0_i32_0 = arith.constant 0 : i32
    return %arg0, %c0_i32 : i32, i32
  }
  func.func @transform_2(%arg0: i32, %arg1: i32) -> (i32, i32) {
    %c0_i32 = arith.constant 0 : i32
    %c0_i32_0 = arith.constant 0 : i32
    return %arg0, %c0_i32 : i32, i32
  }
}

</mosaic_0001>

<llo_original>
// kernel: tpu_custom_call.1
$region0: #{tpu_custom_call.1}
  #allocation0 [shape = 'u32[]', space=smem, size = 0x4, offset = 0x4, fixed_abs, tag = 'smem constant byte address 0x4 - core index']
  #allocation1 [shape = 'u32[144,128]{1,0:T(1,128)}', space=vmem, size = 0x12000, scoped, tag = 'internal scratch']
  #allocation2 [shape = 'f32[2]{0:T(128)}', space=smem, size = 0x200, scoped, tag = 'scratch operand']
  %s0 = inlined_call_operand.hbm [shape: f32[8,256], index: 0, kind: input, shape index: {}]
  %s1 = inlined_call_operand.hbm [shape: f32[1,1], index: 1, kind: output, shape index: {0}]
  %s2 = inlined_call_operand.hbm [shape: f32[1,1], index: 2, kind: output, shape index: {1}]
  %3 = xla_tuple %s1, %s2
  %s4 = sld [smem:[#allocation0]]
  $region34: #{tpu_custom_call.1} parent=0
    _
  %s6 = ssub.s32 1, %s4
  %s7 = scalar_select 0, %s6, %s4
  $region1: #{tpu_custom_call.1} parent=0
    #allocation3 [shape = 'u8[8192]{0}', space=vmem, size = 0x2000, scoped, tag = 'input window, operand 0, single buffered']
    #allocation4 [shape = 's32[1]{0}', space=sflag, size = 0x4, scoped, tag = 'scoped memory for tpu_custom_call.1']
    #allocation5 [shape = 's32[1]{0}', space=sflag, size = 0x4, scoped, tag = 'scoped memory for tpu_custom_call.1']
    #allocation6 [shape = 'u8[512]{0}', space=smem, size = 0x200, scoped, tag = 'output window, operand 0, single buffered']
    #allocation7 [shape = 'u8[512]{0}', space=smem, size = 0x200, scoped, tag = 'output window, operand 1, single buffered']
    #allocation8 [shape = 's32[1]{0}', space=sflag, size = 0x4, scoped, tag = 'scoped memory for tpu_custom_call.1']
    %8 = vsyncpa [#allocation4], 0
    %9 = vsyncpa [#allocation5], 0
    %10 = vsyncpa [#allocation8], 0
    // Predicated region
    $region2: #{tpu_custom_call.1} parent=1 // pred_check
      _
    $region3: #{tpu_custom_call.1} parent=1 // pred_check_branch
      %12 = sbr.rel (0) target = $region5
    $region4: #{tpu_custom_call.1} parent=1 // pred_region
      %s13 = sadd.s32 0, 0
      %p14 = scmp.lt.s32.totalorder %s13, 0
      %s15 = scalar_select %p14, %s13, 0
      %s17 = ssub.s32 256, 256
      %18 = vsyncadd [#allocation4], %s17
      %s19 = smul.addr %s15, 2
      %s20 = smul.addr %s19, 128
      %s21 = scalar_lea.hbm %s0, %s20
      %s23 = sshll.u32 [#allocation3], 4
      %s24 = int_to_ptr.vmem [resolvable:$true] %s23
      %26 = dma.hbm_to_vmem [thread:$0]  %s21, 256, %s24, [#allocation4]
    $region5: #{tpu_custom_call.1} parent=1 // pred_fallthru
      _
    // Predicated region
    $region6: #{tpu_custom_call.1} parent=1 // pred_check
      _
    $region7: #{tpu_custom_call.1} parent=1 // pred_check_branch
      %28 = sbr.rel (0) target = $region9
    $region8: #{tpu_custom_call.1} parent=1 // pred_region
      %29 = dma.done [#allocation4], 256
    $region9: #{tpu_custom_call.1} parent=1 // pred_fallthru
      _
    %s30 = sadd.s32 0, 0
    %p31 = scmp.lt.s32.totalorder %s30, 0
    %s32 = scalar_select %p31, %s30, 0
    %p33 = scmp.eq.s32.totalorder 0, 0
    // Predicated region
    $region10: #{tpu_custom_call.1} parent=1 // pred_check
      %p34 = pneg %p33
    $region11: #{tpu_custom_call.1} parent=1 // pred_check_branch
      %36 = sbr.rel (%p34) target = $region13
    $region12: #{tpu_custom_call.1} parent=1 // pred_region
      %s37 = scalar_lea.smem [#allocation2], 0
      %38 = sst [smem:[%s37]] 0.0
      %s39 = scalar_lea.smem [#allocation2], 1
      %40 = sst [smem:[%s39]] 0.0
    $region13: #{tpu_custom_call.1} parent=1 // pred_fallthru
      _
    %s41 = sadd.s32 0, 0
    %s42 = smul.u32 %s41, 8
    %v43 = vlaneseq
    %v44 = vand.u32 %v43, 127
    %v45 = vadd.s32 %v44, 128
    %vm46 = vcmp.lt.s32.totalorder %v44, 240
    %vm47 = vcmp.lt.s32.totalorder %v45, 240
    %vm48 = vcmp.lt.s32.totalorder %v44, 0
    %v49 = vsub.s32 0, %v44
    %v50 = vsel %vm48, %v49, %v44
    %v51 = vshrl.u32 %v50, 4
    %v52 = vand.u32 %v50, 15
    %v53 = vsub.s32 0, %v52
    %v54 = vsel %vm48, %v53, %v52
    %vm55 = vcmp.lt.s32.totalorder %v45, 0
    %v56 = vsub.s32 0, %v45
    %v57 = vsel %vm55, %v56, %v45
    %v58 = vshrl.u32 %v57, 4
    %v59 = vand.u32 %v57, 15
    %v60 = vsub.s32 0, %v59
    %v61 = vsel %vm55, %v60, %v59
    %vm62 = vcmp.ne.s32.totalorder %v54, 0
    %vm63 = vcmp.ne.s32.totalorder %v61, 0
    %vm64 = vcmp.lt.s32.totalorder %v54, 0
    %vm65 = vcmp.lt.s32.totalorder %v61, 0
    %vm66 = vmand %vm64, %vm62
    %vm67 = vmand %vm65, %vm63
    %v68 = vadd.s32 %v54, 16
    %v69 = vadd.s32 %v61, 16
    %v70 = vsel %vm66, %v68, %v54
    %v71 = vsel %vm67, %v69, %v61
    %vm72 = vcmp.ne.s32.totalorder %v70, 15
    %vm73 = vcmp.ne.s32.totalorder %v71, 15
    %s74 = smul.u32 0, 2
    %s75 = smul.addr %s74, 8
    %s76 = scalar_lea.vmem [#allocation3], %s75
    %v77 = vld [vmem:[%s76] sm:$0xff]
    %v78 = vld [vmem:[%s76 + $0x8] sm:$0xff]
    %s79 = sadd.s32 %s42, 0
    %v80 = vlaneseq
    %v81 = vshrl.u32 %v80, 7
    %v82 = vstv %s79
    %v83 = vadd.s32 %v82, %v81
    %vm84 = vcmp.lt.s32.totalorder %v83, 8
    %v85 = vsel %vm84, 1, 0
    %vm86 = vcmp.eq.s32.totalorder %v85, 1
    %v87 = vsel %vm86, %v77, 0.0
    %v88 = vsel %vm86, %v78, 0.0
    %89 = vrot.lane.b32.xlu0 %v87, 112
    %v90 = vpop.permute.xlu0 %89
    %91 = vrot.lane.b32.xlu0 %v88, 112
    %v92 = vpop.permute.xlu0 %91
    %vm93 = vcmp.lt.s32.totalorder %v44, 112
    %v94 = vsel %vm93, %v90, %v92
    %v95 = vsel %vm93, %v92, %v90
    %v96 = vsub.f32 %v94, %v87
    %v97 = vsub.f32 %v95, %v88
    %98 = vrot.lane.b32.xlu0 %v87, 127
    %v99 = vpop.permute.xlu0 %98
    %100 = vrot.lane.b32.xlu0 %v88, 127
    %v101 = vpop.permute.xlu0 %100
    %vm102 = vcmp.lt.s32.totalorder %v44, 127
    %v103 = vsel %vm102, %v99, %v101
    %v104 = vsel %vm102, %v101, %v99
    %v105 = vsub.f32 %v103, %v87
    %v106 = vsub.f32 %v104, %v88
    %v107 = vmul.f32 %v96, %v96
    %v108 = vmul.f32 %v97, %v97
    %v109 = vsel %vm46, %v107, 0.0
    %v110 = vsel %vm47, %v108, 0.0
    %v111 = vadd.f32 %v109, %v110
    %112 = vadd.xlane.f32.xlu0 %v111
    %v113 = vpop.xlane.xlu0 %112
    %v114 = vrot.slane %v113, 4
    %v115 = vadd.f32 %v113, %v114
    %v116 = vrot.slane %v115, 2
    %v117 = vadd.f32 %v115, %v116
    %v118 = vrot.slane %v117, 1
    %v119 = vadd.f32 %v117, %v118
    %s120 = vtos %v119
    %s121 = sadd.f32 %s120, 0.0
    %v122 = vmul.f32 %v105, %v105
    %v123 = vmul.f32 %v106, %v106
    %v124 = vsel %vm72, %v122, 0.0
    %v125 = vsel %vm73, %v123, 0.0
    %v126 = vadd.f32 %v124, %v125
    %127 = vadd.xlane.f32.xlu0 %v126
    %v128 = vpop.xlane.xlu0 %127
    %v129 = vrot.slane %v128, 4
    %v130 = vadd.f32 %v128, %v129
    %v131 = vrot.slane %v130, 2
    %v132 = vadd.f32 %v130, %v131
    %v133 = vrot.slane %v132, 1
    %v134 = vadd.f32 %v132, %v133
    %s135 = vtos %v134
    %s136 = sadd.f32 %s135, 0.0
    %s137 = sld [smem:[#allocation2]]
    %s138 = sadd.f32 %s137, %s121
    %s139 = scalar_lea.smem [#allocation2], 0
    %140 = sst [smem:[%s139]] %s138
    %s141 = sld [smem:[#allocation2 + $0x1]]
    %s142 = sadd.f32 %s141, %s136
    %s143 = scalar_lea.smem [#allocation2], 1
    %144 = sst [smem:[%s143]] %s142
    // Predicated region
    $region14: #{tpu_custom_call.1} parent=1 // pred_check
      %p145 = pneg %p33
    $region15: #{tpu_custom_call.1} parent=1 // pred_check_branch
      %147 = sbr.rel (%p145) target = $region17
    $region16: #{tpu_custom_call.1} parent=1 // pred_region
      %s148 = sld [smem:[#allocation2]]
      %s149 = scalar_lea.smem [#allocation6], 0
      %150 = sst [smem:[%s149]] %s148
      %s151 = sld [smem:[#allocation2 + $0x1]]
      %s152 = scalar_lea.smem [#allocation7], 0
      %153 = sst [smem:[%s152]] %s151
    $region17: #{tpu_custom_call.1} parent=1 // pred_fallthru
      _
    // Predicated region
    $region18: #{tpu_custom_call.1} parent=1 // pred_check
      _
    $region19: #{tpu_custom_call.1} parent=1 // pred_check_branch
      %155 = sbr.rel (0) target = $region21
    $region20: #{tpu_custom_call.1} parent=1 // pred_region
      %s157 = ssub.s32 16, 16
      %158 = vsyncadd [#allocation5], %s157
      %161 = dma.smem_to_hbm [#allocation6], 16, %s1, [#allocation5]
    $region21: #{tpu_custom_call.1} parent=1 // pred_fallthru
      _
    // Predicated region
    $region22: #{tpu_custom_call.1} parent=1 // pred_check
      _
    $region23: #{tpu_custom_call.1} parent=1 // pred_check_branch
      %163 = sbr.rel (0) target = $region25
    $region24: #{tpu_custom_call.1} parent=1 // pred_region
      %s165 = ssub.s32 16, 16
      %166 = vsyncadd [#allocation8], %s165
      %169 = dma.smem_to_hbm [#allocation7], 16, %s2, [#allocation8]
    $region25: #{tpu_custom_call.1} parent=1 // pred_fallthru
      _
    // Predicated region
    $region26: #{tpu_custom_call.1} parent=1 // pred_check
      _
    $region27: #{tpu_custom_call.1} parent=1 // pred_check_branch
      %171 = sbr.rel (0) target = $region29
    $region28: #{tpu_custom_call.1} parent=1 // pred_region
      %172 = dma.done [#allocation5], 16
    $region29: #{tpu_custom_call.1} parent=1 // pred_fallthru
      _
    // Predicated region
    $region30: #{tpu_custom_call.1} parent=1 // pred_check
      _
    $region31: #{tpu_custom_call.1} parent=1 // pred_check_branch
      %174 = sbr.rel (0) target = $region33
    $region32: #{tpu_custom_call.1} parent=1 // pred_region
      %175 = dma.done [#allocation8], 16
    $region33: #{tpu_custom_call.1} parent=1 // pred_fallthru
      _
    %176 = sfence
    %177 = vsyncpa [#allocation4], 1
    %178 = vsyncpa [#allocation5], 1
    %179 = vsyncpa [#allocation8], 1

</llo_original>
